<compile_context>
chip_gen: v5e
topology: v5e:2x2
jax: 0.10.0
libtpu: 0.0.40
codegen_flags: <defaults>
</compile_context>

<pallas_src>
import functools

import jax
import jax.numpy as jnp
from jax.experimental import pallas as pl
from jax.experimental.pallas import tpu as pltpu


def _reorg_kernel(x_ref, o_ref, t_ref, *, h2_tile, w_half):
    # x_ref: (2*h2_tile, W)            input rows for one (n, c) and one h2-tile
    # o_ref: (2, 2, h2_tile, w_half)   dims = (w_parity, h_parity, h2, w2)
    # t_ref: (W, h2_tile)              VMEM scratch holding the transposed tile
    for hb in range(2):
        # Rows with h-parity hb: sublane-strided read (stride 2 on 2nd-minor dim).
        rows = x_ref[pl.ds(hb, h2_tile, 2), :]        # (h2_tile, W)
        # Put W on the sublane axis so the w-parity split is also a sublane stride.
        t_ref[...] = rows.T                           # (W, h2_tile)
        for wb in range(2):
            cols = t_ref[pl.ds(wb, w_half, 2), :]     # (w_half, h2_tile)
            o_ref[wb, hb] = cols.T                    # (h2_tile, w_half)


def _pick_h2_tile(h_half, w, itemsize, budget_bytes=2 * 1024 * 1024):
    """Largest h2 tile whose (2*h2_tile, W) input block stays under ~budget_bytes."""
    max_rows = max(1, budget_bytes // (2 * w * itemsize))
    if h_half <= max_rows:
        return h_half
    # Prefer an 8-aligned divisor of H2 (keeps the output block's second-minor dim
    # sublane-aligned); fall back to the full dim if none exists.
    for d in range(min(h_half, max_rows), 0, -1):
        if h_half % d == 0 and d % 8 == 0:
            return d
    return h_half


def reorg(x: jax.Array) -> jax.Array:
    """Space-to-depth: (N, C, H, W) -> (N, 4C, H//2, W//2), PyTorch ReOrg order."""
    N, C, H, W = x.shape
    assert H % 2 == 0 and W % 2 == 0, "ReOrg requires even spatial dims"
    H2, W2 = H // 2, W // 2
    h2t = _pick_h2_tile(H2, W, x.dtype.itemsize)
    ht = 2 * h2t

    kernel = functools.partial(_reorg_kernel, h2_tile=h2t, w_half=W2)

    out6 = pl.pallas_call(
        kernel,
        out_shape=jax.ShapeDtypeStruct((N, 2, 2, C, H2, W2), x.dtype),
        grid_spec=pltpu.PrefetchScalarGridSpec(
            num_scalar_prefetch=0,
            grid=(N, C, H2 // h2t),
            in_specs=[
                # One (2*h2t, W) slab of rows per (n, c, h2-tile); leading dims squeezed.
                pl.BlockSpec((None, None, ht, W), lambda n, c, h: (n, c, h, 0)),
            ],
            out_specs=pl.BlockSpec(
                # All four parity groups of this (n, c, h2-tile) in one lane-dense block.
                (None, 2, 2, None, h2t, W2), lambda n, c, h: (n, 0, 0, c, h, 0)
            ),
            scratch_shapes=[pltpu.VMEM((W, h2t), x.dtype)],
        ),
        compiler_params=pltpu.CompilerParams(
            dimension_semantics=("parallel", "parallel", "parallel"),
        ),
        cost_estimate=pl.CostEstimate(
            flops=0,
            transcendentals=0,
            bytes_accessed=2 * x.size * x.dtype.itemsize,
        ),
    )(x)

    # (n, wb, hb, c, h2, w2) -> channel index (2*wb + hb)*C + c: exact PyTorch order.
    return out6.reshape(N, 4 * C, H2, W2)


if __name__ == "__main__":
    # Small shapes consistent with the module: batch=2, channels=4, spatial=16.
    N, C, H, W = 2, 4, 16, 16

    key = jax.random.PRNGKey(0)
    x = jax.random.normal(key, (N, C, H, W), dtype=jnp.float32)

    y = reorg(x)
    y = jax.block_until_ready(y)

    # Reference: direct JAX transliteration of the PyTorch forward.
    y_ref = jnp.concatenate(
        [x[..., ::2, ::2], x[..., 1::2, ::2], x[..., ::2, 1::2], x[..., 1::2, 1::2]],
        axis=1,
    )

    assert y.shape == (N, 4 * C, H // 2, W // 2)
    assert jnp.array_equal(y, y_ref), "mismatch vs reference ReOrg"

    print("KERNEL_OK")
</pallas_src>

<mosaic_0001>
module attributes {stable_mosaic.version = 11 : i64} {
  func.func @_reorg_kernel(%arg0: i32, %arg1: i32, %arg2: i32, %arg3: memref<1x1x16x16xf32, #tpu.memory_space<vmem>>, %arg4: memref<1x2x2x1x8x8xf32, #tpu.memory_space<vmem>>, %arg5: memref<16x8xf32, #tpu.memory_space<vmem>>) attributes {dimension_semantics = [#tpu.dimension_semantics<parallel>, #tpu.dimension_semantics<parallel>, #tpu.dimension_semantics<parallel>], iteration_bounds = array<i64: 2, 4, 1>, scalar_prefetch = 0 : i64, scratch_operands = 1 : i64, tpu.core_type = #tpu.core_type<tc>, window_params = [{transform_indices = @transform_0, window_bounds = array<i64: 1, 1, 16, 16>}, {transform_indices = @transform_1, window_bounds = array<i64: 1, 2, 2, 1, 8, 8>}]} {
    %c0 = arith.constant 0 : index
    %c0_0 = arith.constant 0 : index
    %c0_1 = arith.constant 0 : index
    %c0_2 = arith.constant 0 : index
    %0 = tpu.strided_load %arg3[%c0, %c0_0, %c0_1, %c0_2] {strides = array<i32: 1, 1, 2, 1>} : memref<1x1x16x16xf32, #tpu.memory_space<vmem>>, vector<1x1x8x16xf32>
    %1 = vector.shape_cast %0 : vector<1x1x8x16xf32> to vector<8x16xf32>
    %2 = tpu.transpose %1, [1, 0] : vector<8x16xf32> -> vector<16x8xf32>
    %c0_3 = arith.constant 0 : index
    %c0_4 = arith.constant 0 : index
    %3 = vector.load %arg5[%c0_3, %c0_4] : memref<16x8xf32, #tpu.memory_space<vmem>>, vector<16x8xf32>
    tpu.vector_store %arg5[%c0_3, %c0_4], %2 {strides = array<i32>} : memref<16x8xf32, #tpu.memory_space<vmem>>, vector<16x8xf32>,
    %c0_5 = arith.constant 0 : index
    %c0_6 = arith.constant 0 : index
    %4 = tpu.strided_load %arg5[%c0_5, %c0_6] {strides = array<i32: 2, 1>} : memref<16x8xf32, #tpu.memory_space<vmem>>, vector<8x8xf32>
    %5 = tpu.transpose %4, [1, 0] : vector<8x8xf32> -> vector<8x8xf32>
    %c0_7 = arith.constant 0 : index
    %c0_8 = arith.constant 0 : index
    %c0_9 = arith.constant 0 : index
    %c0_10 = arith.constant 0 : index
    %c0_11 = arith.constant 0 : index
    %c0_12 = arith.constant 0 : index
    %6 = vector.load %arg4[%c0_7, %c0_8, %c0_9, %c0_10, %c0_11, %c0_12] : memref<1x2x2x1x8x8xf32, #tpu.memory_space<vmem>>, vector<1x1x1x1x8x8xf32>
    %7 = vector.shape_cast %6 : vector<1x1x1x1x8x8xf32> to vector<8x8xf32>
    %8 = vector.shape_cast %5 : vector<8x8xf32> to vector<1x1x1x1x8x8xf32>
    tpu.vector_store %arg4[%c0_7, %c0_8, %c0_9, %c0_10, %c0_11, %c0_12], %8 {strides = array<i32>} : memref<1x2x2x1x8x8xf32, #tpu.memory_space<vmem>>, vector<1x1x1x1x8x8xf32>,
    %c1 = arith.constant 1 : index
    %c0_13 = arith.constant 0 : index
    %9 = tpu.strided_load %arg5[%c1, %c0_13] {strides = array<i32: 2, 1>} : memref<16x8xf32, #tpu.memory_space<vmem>>, vector<8x8xf32>
    %10 = tpu.transpose %9, [1, 0] : vector<8x8xf32> -> vector<8x8xf32>
    %c0_14 = arith.constant 0 : index
    %c1_15 = arith.constant 1 : index
    %c0_16 = arith.constant 0 : index
    %c0_17 = arith.constant 0 : index
    %c0_18 = arith.constant 0 : index
    %c0_19 = arith.constant 0 : index
    %11 = vector.load %arg4[%c0_14, %c1_15, %c0_16, %c0_17, %c0_18, %c0_19] : memref<1x2x2x1x8x8xf32, #tpu.memory_space<vmem>>, vector<1x1x1x1x8x8xf32>
    %12 = vector.shape_cast %11 : vector<1x1x1x1x8x8xf32> to vector<8x8xf32>
    %13 = vector.shape_cast %10 : vector<8x8xf32> to vector<1x1x1x1x8x8xf32>
    tpu.vector_store %arg4[%c0_14, %c1_15, %c0_16, %c0_17, %c0_18, %c0_19], %13 {strides = array<i32>} : memref<1x2x2x1x8x8xf32, #tpu.memory_space<vmem>>, vector<1x1x1x1x8x8xf32>,
    %c0_20 = arith.constant 0 : index
    %c0_21 = arith.constant 0 : index
    %c1_22 = arith.constant 1 : index
    %c0_23 = arith.constant 0 : index
    %14 = tpu.strided_load %arg3[%c0_20, %c0_21, %c1_22, %c0_23] {strides = array<i32: 1, 1, 2, 1>} : memref<1x1x16x16xf32, #tpu.memory_space<vmem>>, vector<1x1x8x16xf32>
    %15 = vector.shape_cast %14 : vector<1x1x8x16xf32> to vector<8x16xf32>
    %16 = tpu.transpose %15, [1, 0] : vector<8x16xf32> -> vector<16x8xf32>
    %c0_24 = arith.constant 0 : index
    %c0_25 = arith.constant 0 : index
    %17 = vector.load %arg5[%c0_24, %c0_25] : memref<16x8xf32, #tpu.memory_space<vmem>>, vector<16x8xf32>
    tpu.vector_store %arg5[%c0_24, %c0_25], %16 {strides = array<i32>} : memref<16x8xf32, #tpu.memory_space<vmem>>, vector<16x8xf32>,
    %c0_26 = arith.constant 0 : index
    %c0_27 = arith.constant 0 : index
    %18 = tpu.strided_load %arg5[%c0_26, %c0_27] {strides = array<i32: 2, 1>} : memref<16x8xf32, #tpu.memory_space<vmem>>, vector<8x8xf32>
    %19 = tpu.transpose %18, [1, 0] : vector<8x8xf32> -> vector<8x8xf32>
    %c0_28 = arith.constant 0 : index
    %c0_29 = arith.constant 0 : index
    %c1_30 = arith.constant 1 : index
    %c0_31 = arith.constant 0 : index
    %c0_32 = arith.constant 0 : index
    %c0_33 = arith.constant 0 : index
    %20 = vector.load %arg4[%c0_28, %c0_29, %c1_30, %c0_31, %c0_32, %c0_33] : memref<1x2x2x1x8x8xf32, #tpu.memory_space<vmem>>, vector<1x1x1x1x8x8xf32>
    %21 = vector.shape_cast %20 : vector<1x1x1x1x8x8xf32> to vector<8x8xf32>
    %22 = vector.shape_cast %19 : vector<8x8xf32> to vector<1x1x1x1x8x8xf32>
    tpu.vector_store %arg4[%c0_28, %c0_29, %c1_30, %c0_31, %c0_32, %c0_33], %22 {strides = array<i32>} : memref<1x2x2x1x8x8xf32, #tpu.memory_space<vmem>>, vector<1x1x1x1x8x8xf32>,
    %c1_34 = arith.constant 1 : index
    %c0_35 = arith.constant 0 : index
    %23 = tpu.strided_load %arg5[%c1_34, %c0_35] {strides = array<i32: 2, 1>} : memref<16x8xf32, #tpu.memory_space<vmem>>, vector<8x8xf32>
    %24 = tpu.transpose %23, [1, 0] : vector<8x8xf32> -> vector<8x8xf32>
    %c0_36 = arith.constant 0 : index
    %c1_37 = arith.constant 1 : index
    %c1_38 = arith.constant 1 : index
    %c0_39 = arith.constant 0 : index
    %c0_40 = arith.constant 0 : index
    %c0_41 = arith.constant 0 : index
    %25 = vector.load %arg4[%c0_36, %c1_37, %c1_38, %c0_39, %c0_40, %c0_41] : memref<1x2x2x1x8x8xf32, #tpu.memory_space<vmem>>, vector<1x1x1x1x8x8xf32>
    %26 = vector.shape_cast %25 : vector<1x1x1x1x8x8xf32> to vector<8x8xf32>
    %27 = vector.shape_cast %24 : vector<8x8xf32> to vector<1x1x1x1x8x8xf32>
    tpu.vector_store %arg4[%c0_36, %c1_37, %c1_38, %c0_39, %c0_40, %c0_41], %27 {strides = array<i32>} : memref<1x2x2x1x8x8xf32, #tpu.memory_space<vmem>>, vector<1x1x1x1x8x8xf32>,
    return
  }
  func.func @transform_0(%arg0: i32, %arg1: i32, %arg2: i32) -> (i32, i32, i32, i32) {
    %c0_i32 = arith.constant 0 : i32
    %c0_i32_0 = arith.constant 0 : i32
    return %arg0, %arg1, %arg2, %c0_i32 : i32, i32, i32, i32
  }
  func.func @transform_1(%arg0: i32, %arg1: i32, %arg2: i32) -> (i32, i32, i32, i32, i32, i32) {
    %c0_i32 = arith.constant 0 : i32
    %c0_i32_0 = arith.constant 0 : i32
    %c0_i32_1 = arith.constant 0 : i32
    %c0_i32_2 = arith.constant 0 : i32
    return %arg0, %c0_i32, %c0_i32_0, %arg1, %arg2, %c0_i32_1 : i32, i32, i32, i32, i32, i32
  }
}

</mosaic_0001>

<llo_original>
// kernel: tpu_custom_call.1
$region0: #{tpu_custom_call.1}
  #allocation0 [shape = 'u32[]', space=smem, size = 0x4, offset = 0x4, fixed_abs, tag = 'smem constant byte address 0x4 - core index']
  #allocation1 [shape = 'u32[72,128]{1,0:T(1,128)}', space=vmem, size = 0x9000, scoped, tag = 'internal scratch']
  #allocation2 [shape = 'f32[16,8]{1,0:T(8,128)}', space=vmem, size = 0x2000, scoped, tag = 'scratch operand']
  %s0 = inlined_call_operand.hbm [shape: f32[2,4,16,16], index: 0, kind: input, shape index: {}]
  %s1 = inlined_call_operand.hbm [shape: f32[2,2,2,4,8,8], index: 1, kind: output, shape index: {}]
  %s2 = sld [smem:[#allocation0]]
  $region41: #{tpu_custom_call.1} parent=0
    _
  %s4 = ssub.s32 1, %s2
  %s5 = scalar_select 0, %s4, %s2
  $region1: #{tpu_custom_call.1} parent=0
    #allocation3 [shape = 'u8[16384]{0}', space=vmem, size = 0x4000, scoped, tag = 'input window, operand 0']
    #allocation4 [shape = 's32[2]{0}', space=sflag, size = 0x8, scoped, tag = 'scoped memory for tpu_custom_call.1']
    #allocation5 [shape = 's32[2]{0}', space=sflag, size = 0x8, scoped, tag = 'scoped memory for tpu_custom_call.1']
    #allocation6 [shape = 'u8[32768]{0}', space=vmem, size = 0x8000, scoped, tag = 'output window, operand 0']
    %6 = vsyncpa [#allocation4], 0
    %s7 = scalar_lea.sflag [#allocation4], 1
    %8 = vsyncpa %s7, 0
    %9 = vsyncpa [#allocation5], 0
    %s10 = scalar_lea.sflag [#allocation5], 1
    %11 = vsyncpa %s10, 0
    loop: start=0, step=1, limit=10
    $region2: #{tpu_custom_call.1} parent=1 // loop_pre_header
      _
    $region3: #{tpu_custom_call.1} parent=1 // loop_header
      %s13 = sphi 0, %s17
      %p14 = scmp.ge.s32.totalorder %s13, 10
      %s20 = sphi 0, %s39
      %s21 = sphi 0, %s35
      %s22 = sphi 0, %s31
      %s23 = sphi 0, %s20
      %s24 = sphi 0, %s21
      %s25 = sphi 0, %s22
      %s26 = sphi 0, %s23
      %s27 = sphi 0, %s24
      %s28 = sphi 0, %s25
      %s46 = sphi 0, %s48
      %s49 = sphi 0, %s46
      %s50 = sphi 0, %s49
      %s66 = sphi 0, %s50
      %s76 = sphi 0, %s78
      %s79 = sphi 0, %s76
      %s80 = sphi 0, %s79
      %s96 = sphi 0, %s80
    $region4: #{tpu_custom_call.1} parent=1 // loop_header_branch
      %16 = sbr.rel (%p14) target = $region8
    $region5: #{tpu_custom_call.1} parent=1 // loop_body
      %s18 = ssub.s32 %s13, 1
      %s19 = ssub.s32 %s13, 2
      %s29 = sadd.s32 1, %s22
      %p30 = scmp.ge.s32.totalorder %s29, 1
      %s31 = scalar_select %p30, 0, %s29
      %s32 = sadd.s32 1, %s21
      %s33 = scalar_select %p30, %s32, %s21
      %p34 = scmp.ge.s32.totalorder %s33, 4
      %s35 = scalar_select %p34, 0, %s33
      %s36 = sadd.s32 1, %s20
      %s37 = scalar_select %p34, %s36, %s20
      %p38 = scmp.ge.s32.totalorder %s37, 2
      %s39 = scalar_select %p38, 0, %s37
      %s40 = ssub.s32 %s20, %s39
      %s41 = ssub.s32 %s21, %s35
      %s42 = sor.u32 %s40, %s41
      %s43 = ssub.s32 %s22, %s31
      %s44 = sor.u32 %s42, %s43
      %p45 = scmp.eq.s32.totalorder %s44, 0
      %s47 = sadd.s32 %s46, 1
      %s48 = scalar_select %p45, %s46, %s47
      %p51 = pneg %p45
      %p52 = scmp.eq.s32.totalorder %s13, 7
      %p53 = por %p51, %p52
      %p54 = scmp.ne.s32.totalorder %s46, %s49
      %p55 = scmp.eq.s32.totalorder %s13, 0
      %p56 = por %p54, %p55
      %p57 = scmp.ne.s32.totalorder %s46, %s49
      %p58 = scmp.eq.s32.totalorder %s18, 7
      %p59 = por %p57, %p58
      %p60 = scmp.ne.s32.totalorder %s49, %s50
      %p61 = scmp.eq.s32.totalorder %s18, 0
      %p62 = por %p60, %p61
      %p63 = scmp.ne.s32.totalorder %s49, %s50
      %p64 = scmp.eq.s32.totalorder %s19, 7
      %p65 = por %p63, %p64
      %p67 = scmp.ne.s32.totalorder %s50, %s66
      %p68 = scmp.eq.s32.totalorder %s19, 0
      %p69 = por %p67, %p68
      %s70 = ssub.s32 %s20, %s39
      %s71 = ssub.s32 %s21, %s35
      %s72 = sor.u32 %s70, %s71
      %s73 = ssub.s32 %s22, %s31
      %s74 = sor.u32 %s72, %s73
      %p75 = scmp.eq.s32.totalorder %s74, 0
      %s77 = sadd.s32 %s76, 1
      %s78 = scalar_select %p75, %s76, %s77
      %p81 = pneg %p75
      %p82 = scmp.eq.s32.totalorder %s13, 7
      %p83 = por %p81, %p82
      %p84 = scmp.ne.s32.totalorder %s76, %s79
      %p85 = scmp.eq.s32.totalorder %s13, 0
      %p86 = por %p84, %p85
      %p87 = scmp.ne.s32.totalorder %s76, %s79
      %p88 = scmp.eq.s32.totalorder %s18, 7
      %p89 = por %p87, %p88
      %p90 = scmp.ne.s32.totalorder %s79, %s80
      %p91 = scmp.eq.s32.totalorder %s18, 0
      %p92 = por %p90, %p91
      %p93 = scmp.ne.s32.totalorder %s79, %s80
      %p94 = scmp.eq.s32.totalorder %s19, 7
      %p95 = por %p93, %p94
      %p97 = scmp.ne.s32.totalorder %s80, %s96
      %p98 = scmp.eq.s32.totalorder %s19, 0
      %p99 = por %p97, %p98
      %p100 = scmp.le.s32.totalorder 1, %s13
      %p101 = scmp.lt.s32.totalorder %s13, 9
      %p102 = pnand %p100, %p101
      %p103 = pneg %p102
      // Predicated region
      $region9: #{tpu_custom_call.1} parent=5 // pred_check
        _
      $region10: #{tpu_custom_call.1} parent=5 // pred_check_branch
        %105 = sbr.rel (%p102) target = $region12
      $region11: #{tpu_custom_call.1} parent=5 // pred_region
        %s106 = ssub.s32 %s13, 1
      $region12: #{tpu_custom_call.1} parent=5 // pred_fallthru
        _
      %p107 = scmp.lt.s32.totalorder %s13, 8
      // Predicated region
      $region13: #{tpu_custom_call.1} parent=5 // pred_check
        %p108 = pneg %p107
      $region14: #{tpu_custom_call.1} parent=5 // pred_check_branch
        %110 = sbr.rel (%p108) target = $region16
      $region15: #{tpu_custom_call.1} parent=5 // pred_region
        // Predicated region
        $region17: #{tpu_custom_call.1} parent=15 // pred_check
          %p111 = pneg %p56
        $region18: #{tpu_custom_call.1} parent=15 // pred_check_branch
          %113 = sbr.rel (%p111) target = $region20
        $region19: #{tpu_custom_call.1} parent=15 // pred_region
          %s114 = sand.u32 %s46, 1
          %s115 = scalar_lea.sflag [#allocation4], %s114
          %s116 = sand.u32 %s46, 1
          %s117 = smul.addr %s116, 16
          %s118 = scalar_lea.vmem [#allocation3], %s117
          %s119 = smul.u32 2, %s22
          %121 = vsyncadd %s115, 0
          %s122 = smul.addr %s21, 2
          %s123 = sadd.s32 %s119, %s122
          %s124 = smul.addr %s20, 8
          %s125 = sadd.s32 %s123, %s124
          %s126 = smul.addr %s125, 8
          %s127 = scalar_lea.hbm %s0, %s126
          %s128 = sshll.u32 %s127, 4
          %s129 = int_to_ptr.hbm [resolvable:$true] %s128
          %s130 = sshll.u32 %s118, 4
          %s131 = int_to_ptr.vmem [resolvable:$true] %s130
          %136 = dma.hbm_to_vmem [thread:$0]  %s129, 256, %s131, %s115, 128, 128, 8
        $region20: #{tpu_custom_call.1} parent=15 // pred_fallthru
          _
      $region16: #{tpu_custom_call.1} parent=5 // pred_fallthru
        _
      %p137 = scmp.le.s32.totalorder 1, %s13
      %p138 = scmp.lt.s32.totalorder %s13, 9
      %p139 = pnand %p137, %p138
      %p140 = pneg %p139
      // Predicated region
      $region21: #{tpu_custom_call.1} parent=5 // pred_check
        _
      $region22: #{tpu_custom_call.1} parent=5 // pred_check_branch
        %142 = sbr.rel (%p139) target = $region24
      $region23: #{tpu_custom_call.1} parent=5 // pred_region
        %s143 = ssub.s32 %s13, 1
        %s144 = sand.u32 %s49, 1
        %s145 = scalar_lea.sflag [#allocation4], %s144
        %s146 = sand.u32 %s49, 1
        %s147 = smul.addr %s146, 16
        %s148 = scalar_lea.vmem [#allocation3], %s147
        // Predicated region
        $region25: #{tpu_custom_call.1} parent=23 // pred_check
          %p149 = pneg %p62
        $region26: #{tpu_custom_call.1} parent=23 // pred_check_branch
          %151 = sbr.rel (%p149) target = $region28
        $region27: #{tpu_custom_call.1} parent=23 // pred_region
          %153 = dma.done %s145, 256
        $region28: #{tpu_custom_call.1} parent=23 // pred_fallthru
          _
        %s154 = sand.u32 %s49, 1
        %s155 = scalar_lea.sflag [#allocation4], %s154
        %s156 = sand.u32 %s49, 1
        %s157 = smul.addr %s156, 16
        %s158 = scalar_lea.vmem [#allocation3], %s157
        %p159 = pneg %p62
        %p160 = pneg %p59
        %p161 = pneg %p92
        %p162 = pneg %p89
        %s163 = sand.u32 %s79, 1
        %s164 = scalar_lea.sflag [#allocation5], %s163
        %s165 = sand.u32 %s79, 1
        %s166 = smul.addr %s165, 32
        %s167 = scalar_lea.vmem [#allocation6], %s166
        %s168 = smul.u32 2, %s25
        %v169 = vld [vmem:[%s148] ss:$2 sm:$0xff]
        %170 = vxpose.xlu0.b32.start [1/16] %v169, 128
        %171 = vxpose.xlu0.b32.cont [2/16] 0.0, 128
        %172 = vxpose.xlu0.b32.cont [3/16] 0.0, 128
        %173 = vxpose.xlu0.b32.cont [4/16] 0.0, 128
        %174 = vxpose.xlu0.b32.cont [5/16] 0.0, 128
        %175 = vxpose.xlu0.b32.cont [6/16] 0.0, 128
        %176 = vxpose.xlu0.b32.cont [7/16] 0.0, 128
        %177 = vxpose.xlu0.b32.cont [8/16] 0.0, 128
        %178 = vxpose.xlu0.b32.cont [9/16] 0.0, 128
        %179 = vxpose.xlu0.b32.cont [10/16] 0.0, 128
        %180 = vxpose.xlu0.b32.cont [11/16] 0.0, 128
        %181 = vxpose.xlu0.b32.cont [12/16] 0.0, 128
        %182 = vxpose.xlu0.b32.cont [13/16] 0.0, 128
        %183 = vxpose.xlu0.b32.cont [14/16] 0.0, 128
        %184 = vxpose.xlu0.b32.cont [15/16] 0.0, 128
        %185 = vxpose.xlu0.b32.end [16/16] 0.0, 128
        %v186 = vpop.trf.xlu0
        %v187 = vpop.trf.xlu0
        %v188 = vpop.trf.xlu0
        %v189 = vpop.trf.xlu0
        %v190 = vpop.trf.xlu0
        %v191 = vpop.trf.xlu0
        %v192 = vpop.trf.xlu0
        %v193 = vpop.trf.xlu0
        %v194 = vpop.trf.xlu0
        %v195 = vpop.trf.xlu0
        %v196 = vpop.trf.xlu0
        %v197 = vpop.trf.xlu0
        %v198 = vpop.trf.xlu0
        %v199 = vpop.trf.xlu0
        %v200 = vpop.trf.xlu0
        %v201 = vpop.trf.xlu0
        %vm202 = vcmask 64512
        %203 = vst.msk [vmem:[#allocation2] sm:$0xff] %vm202, %v186
        %204 = vst.msk [vmem:[#allocation2 + $0x8] sm:$0xff] %vm202, %v187
        %v205 = vld [vmem:[#allocation2] ss:$2 sm:$0xff]
        %206 = vxpose.xlu0.b32.start [1/16] %v205, 128
        %207 = vxpose.xlu0.b32.cont [2/16] 0.0, 128
        %208 = vxpose.xlu0.b32.cont [3/16] 0.0, 128
        %209 = vxpose.xlu0.b32.cont [4/16] 0.0, 128
        %210 = vxpose.xlu0.b32.cont [5/16] 0.0, 128
        %211 = vxpose.xlu0.b32.cont [6/16] 0.0, 128
        %212 = vxpose.xlu0.b32.cont [7/16] 0.0, 128
        %213 = vxpose.xlu0.b32.cont [8/16] 0.0, 128
        %214 = vxpose.xlu0.b32.cont [9/16] 0.0, 128
        %215 = vxpose.xlu0.b32.cont [10/16] 0.0, 128
        %216 = vxpose.xlu0.b32.cont [11/16] 0.0, 128
        %217 = vxpose.xlu0.b32.cont [12/16] 0.0, 128
        %218 = vxpose.xlu0.b32.cont [13/16] 0.0, 128
        %219 = vxpose.xlu0.b32.cont [14/16] 0.0, 128
        %220 = vxpose.xlu0.b32.cont [15/16] 0.0, 128
        %221 = vxpose.xlu0.b32.end [16/16] 0.0, 128
        %v222 = vpop.trf.xlu0
        %v223 = vpop.trf.xlu0
        %v224 = vpop.trf.xlu0
        %v225 = vpop.trf.xlu0
        %v226 = vpop.trf.xlu0
        %v227 = vpop.trf.xlu0
        %v228 = vpop.trf.xlu0
        %v229 = vpop.trf.xlu0
        %v230 = vpop.trf.xlu0
        %v231 = vpop.trf.xlu0
        %v232 = vpop.trf.xlu0
        %v233 = vpop.trf.xlu0
        %v234 = vpop.trf.xlu0
        %v235 = vpop.trf.xlu0
        %v236 = vpop.trf.xlu0
        %v237 = vpop.trf.xlu0
        %238 = vst.msk [vmem:[%s167] sm:$0xff] %vm202, %v222
        %s239 = scalar_lea.vmem [#allocation2], 1
        %v240 = vld [vmem:[%s239] ss:$2 sm:$0xff]
        %241 = vxpose.xlu0.b32.start [1/16] %v240, 128
        %242 = vxpose.xlu0.b32.cont [2/16] 0.0, 128
        %243 = vxpose.xlu0.b32.cont [3/16] 0.0, 128
        %244 = vxpose.xlu0.b32.cont [4/16] 0.0, 128
        %245 = vxpose.xlu0.b32.cont [5/16] 0.0, 128
        %246 = vxpose.xlu0.b32.cont [6/16] 0.0, 128
        %247 = vxpose.xlu0.b32.cont [7/16] 0.0, 128
        %248 = vxpose.xlu0.b32.cont [8/16] 0.0, 128
        %249 = vxpose.xlu0.b32.cont [9/16] 0.0, 128
        %250 = vxpose.xlu0.b32.cont [10/16] 0.0, 128
        %251 = vxpose.xlu0.b32.cont [11/16] 0.0, 128
        %252 = vxpose.xlu0.b32.cont [12/16] 0.0, 128
        %253 = vxpose.xlu0.b32.cont [13/16] 0.0, 128
        %254 = vxpose.xlu0.b32.cont [14/16] 0.0, 128
        %255 = vxpose.xlu0.b32.cont [15/16] 0.0, 128
        %256 = vxpose.xlu0.b32.end [16/16] 0.0, 128
        %v257 = vpop.trf.xlu0
        %v258 = vpop.trf.xlu0
        %v259 = vpop.trf.xlu0
        %v260 = vpop.trf.xlu0
        %v261 = vpop.trf.xlu0
        %v262 = vpop.trf.xlu0
        %v263 = vpop.trf.xlu0
        %v264 = vpop.trf.xlu0
        %v265 = vpop.trf.xlu0
        %v266 = vpop.trf.xlu0
        %v267 = vpop.trf.xlu0
        %v268 = vpop.trf.xlu0
        %v269 = vpop.trf.xlu0
        %v270 = vpop.trf.xlu0
        %v271 = vpop.trf.xlu0
        %v272 = vpop.trf.xlu0
        %s273 = scalar_lea.vmem %s167, 16 [#allocation6]
        %274 = vst.msk [vmem:[%s273] sm:$0xff] %vm202, %v257
        %s275 = scalar_lea.vmem %s148, 1 [#allocation3]
        %v276 = vld [vmem:[%s275] ss:$2 sm:$0xff]
        %277 = vxpose.xlu0.b32.start [1/16] %v276, 128
        %278 = vxpose.xlu0.b32.cont [2/16] 0.0, 128
        %279 = vxpose.xlu0.b32.cont [3/16] 0.0, 128
        %280 = vxpose.xlu0.b32.cont [4/16] 0.0, 128
        %281 = vxpose.xlu0.b32.cont [5/16] 0.0, 128
        %282 = vxpose.xlu0.b32.cont [6/16] 0.0, 128
        %283 = vxpose.xlu0.b32.cont [7/16] 0.0, 128
        %284 = vxpose.xlu0.b32.cont [8/16] 0.0, 128
        %285 = vxpose.xlu0.b32.cont [9/16] 0.0, 128
        %286 = vxpose.xlu0.b32.cont [10/16] 0.0, 128
        %287 = vxpose.xlu0.b32.cont [11/16] 0.0, 128
        %288 = vxpose.xlu0.b32.cont [12/16] 0.0, 128
        %289 = vxpose.xlu0.b32.cont [13/16] 0.0, 128
        %290 = vxpose.xlu0.b32.cont [14/16] 0.0, 128
        %291 = vxpose.xlu0.b32.cont [15/16] 0.0, 128
        %292 = vxpose.xlu0.b32.end [16/16] 0.0, 128
        %v293 = vpop.trf.xlu0
        %v294 = vpop.trf.xlu0
        %v295 = vpop.trf.xlu0
        %v296 = vpop.trf.xlu0
        %v297 = vpop.trf.xlu0
        %v298 = vpop.trf.xlu0
        %v299 = vpop.trf.xlu0
        %v300 = vpop.trf.xlu0
        %v301 = vpop.trf.xlu0
        %v302 = vpop.trf.xlu0
        %v303 = vpop.trf.xlu0
        %v304 = vpop.trf.xlu0
        %v305 = vpop.trf.xlu0
        %v306 = vpop.trf.xlu0
        %v307 = vpop.trf.xlu0
        %v308 = vpop.trf.xlu0
        %309 = vst.msk [vmem:[#allocation2] sm:$0xff] %vm202, %v293
        %310 = vst.msk [vmem:[#allocation2 + $0x8] sm:$0xff] %vm202, %v294
        %v311 = vld [vmem:[#allocation2] ss:$2 sm:$0xff]
        %312 = vxpose.xlu0.b32.start [1/16] %v311, 128
        %313 = vxpose.xlu0.b32.cont [2/16] 0.0, 128
        %314 = vxpose.xlu0.b32.cont [3/16] 0.0, 128
        %315 = vxpose.xlu0.b32.cont [4/16] 0.0, 128
        %316 = vxpose.xlu0.b32.cont [5/16] 0.0, 128
        %317 = vxpose.xlu0.b32.cont [6/16] 0.0, 128
        %318 = vxpose.xlu0.b32.cont [7/16] 0.0, 128
        %319 = vxpose.xlu0.b32.cont [8/16] 0.0, 128
        %320 = vxpose.xlu0.b32.cont [9/16] 0.0, 128
        %321 = vxpose.xlu0.b32.cont [10/16] 0.0, 128
        %322 = vxpose.xlu0.b32.cont [11/16] 0.0, 128
        %323 = vxpose.xlu0.b32.cont [12/16] 0.0, 128
        %324 = vxpose.xlu0.b32.cont [13/16] 0.0, 128
        %325 = vxpose.xlu0.b32.cont [14/16] 0.0, 128
        %326 = vxpose.xlu0.b32.cont [15/16] 0.0, 128
        %327 = vxpose.xlu0.b32.end [16/16] 0.0, 128
        %v328 = vpop.trf.xlu0
        %v329 = vpop.trf.xlu0
        %v330 = vpop.trf.xlu0
        %v331 = vpop.trf.xlu0
        %v332 = vpop.trf.xlu0
        %v333 = vpop.trf.xlu0
        %v334 = vpop.trf.xlu0
        %v335 = vpop.trf.xlu0
        %v336 = vpop.trf.xlu0
        %v337 = vpop.trf.xlu0
        %v338 = vpop.trf.xlu0
        %v339 = vpop.trf.xlu0
        %v340 = vpop.trf.xlu0
        %v341 = vpop.trf.xlu0
        %v342 = vpop.trf.xlu0
        %v343 = vpop.trf.xlu0
        %s344 = scalar_lea.vmem %s167, 8 [#allocation6]
        %345 = vst.msk [vmem:[%s344] sm:$0xff] %vm202, %v328
        %v346 = vld [vmem:[%s239] ss:$2 sm:$0xff]
        %347 = vxpose.xlu0.b32.start [1/16] %v346, 128
        %348 = vxpose.xlu0.b32.cont [2/16] 0.0, 128
        %349 = vxpose.xlu0.b32.cont [3/16] 0.0, 128
        %350 = vxpose.xlu0.b32.cont [4/16] 0.0, 128
        %351 = vxpose.xlu0.b32.cont [5/16] 0.0, 128
        %352 = vxpose.xlu0.b32.cont [6/16] 0.0, 128
        %353 = vxpose.xlu0.b32.cont [7/16] 0.0, 128
        %354 = vxpose.xlu0.b32.cont [8/16] 0.0, 128
        %355 = vxpose.xlu0.b32.cont [9/16] 0.0, 128
        %356 = vxpose.xlu0.b32.cont [10/16] 0.0, 128
        %357 = vxpose.xlu0.b32.cont [11/16] 0.0, 128
        %358 = vxpose.xlu0.b32.cont [12/16] 0.0, 128
        %359 = vxpose.xlu0.b32.cont [13/16] 0.0, 128
        %360 = vxpose.xlu0.b32.cont [14/16] 0.0, 128
        %361 = vxpose.xlu0.b32.cont [15/16] 0.0, 128
        %362 = vxpose.xlu0.b32.end [16/16] 0.0, 128
        %v363 = vpop.trf.xlu0
        %v364 = vpop.trf.xlu0
        %v365 = vpop.trf.xlu0
        %v366 = vpop.trf.xlu0
        %v367 = vpop.trf.xlu0
        %v368 = vpop.trf.xlu0
        %v369 = vpop.trf.xlu0
        %v370 = vpop.trf.xlu0
        %v371 = vpop.trf.xlu0
        %v372 = vpop.trf.xlu0
        %v373 = vpop.trf.xlu0
        %v374 = vpop.trf.xlu0
        %v375 = vpop.trf.xlu0
        %v376 = vpop.trf.xlu0
        %v377 = vpop.trf.xlu0
        %v378 = vpop.trf.xlu0
        %s379 = scalar_lea.vmem %s167, 24 [#allocation6]
        %380 = vst.msk [vmem:[%s379] sm:$0xff] %vm202, %v363
        %s381 = sand.u32 %s79, 1
        %s382 = scalar_lea.sflag [#allocation5], %s381
        %s383 = sand.u32 %s79, 1
        %s384 = smul.addr %s383, 32
        %s385 = scalar_lea.vmem [#allocation6], %s384
        // Predicated region
        $region29: #{tpu_custom_call.1} parent=23 // pred_check
          %p386 = pneg %p89
        $region30: #{tpu_custom_call.1} parent=23 // pred_check_branch
          %388 = sbr.rel (%p386) target = $region32
        $region31: #{tpu_custom_call.1} parent=23 // pred_region
          %390 = vsyncadd %s382, 0
          %s391 = sadd.s32 %s25, %s24
          %s392 = smul.addr %s23, 16
          %s393 = sadd.s32 %s391, %s392
          %s394 = smul.addr %s393, 8
          %s395 = scalar_lea.hbm %s1, %s394
          %s396 = sshll.u32 %s385, 4
          %s397 = int_to_ptr.vmem [resolvable:$true] %s396
          %s398 = sshll.u32 %s395, 4
          %s399 = int_to_ptr.hbm [resolvable:$true] %s398
          %404 = dma.vmem_to_hbm [thread:$0]  %s397, 512, %s399, %s382, 128, 512, 8
        $region32: #{tpu_custom_call.1} parent=23 // pred_fallthru
          _
      $region24: #{tpu_custom_call.1} parent=5 // pred_fallthru
        _
      %p405 = scmp.le.s32.totalorder 2, %s13
      // Predicated region
      $region33: #{tpu_custom_call.1} parent=5 // pred_check
        %p406 = pneg %p405
      $region34: #{tpu_custom_call.1} parent=5 // pred_check_branch
        %408 = sbr.rel (%p406) target = $region36
      $region35: #{tpu_custom_call.1} parent=5 // pred_region
        %s409 = ssub.s32 %s13, 2
        // Predicated region
        $region37: #{tpu_custom_call.1} parent=35 // pred_check
          %p410 = pneg %p95
        $region38: #{tpu_custom_call.1} parent=35 // pred_check_branch
          %412 = sbr.rel (%p410) target = $region40
        $region39: #{tpu_custom_call.1} parent=35 // pred_region
          %s413 = sand.u32 %s80, 1
          %s414 = scalar_lea.sflag [#allocation5], %s413
          %s415 = sand.u32 %s80, 1
          %s416 = smul.addr %s415, 32
          %s417 = scalar_lea.vmem [#allocation6], %s416
          %419 = dma.done %s414, 512
        $region40: #{tpu_custom_call.1} parent=35 // pred_fallthru
          _
      $region36: #{tpu_custom_call.1} parent=5 // pred_fallthru
        _
    $region6: #{tpu_custom_call.1} parent=1 // loop_footer
      %s17 = sadd.s32 1, %s13
    $region7: #{tpu_custom_call.1} parent=1 // loop_footer_branch
      %12 = sbr.rel target = $region3
    $region8: #{tpu_custom_call.1} parent=1 // loop_exit
      _
    %420 = vsyncpa [#allocation4], 1
    %s421 = scalar_lea.sflag [#allocation4], 1
    %422 = vsyncpa %s421, 1
    %423 = vsyncpa [#allocation5], 1
    %s424 = scalar_lea.sflag [#allocation5], 1
    %425 = vsyncpa %s424, 1

</llo_original>
